<compile_context>
chip_gen: v6e
topology: v6e:2x2x1
jax: 0.10.0
libtpu: 0.0.40
codegen_flags: <defaults>
</compile_context>

<pallas_src>
import functools

import numpy as np
import jax
import jax.numpy as jnp
from jax.experimental import pallas as pl
from jax.experimental.pallas import tpu as pltpu


_TILE_LANES = 8192          # lanes per grid step in the tiled (large-N) path
_SINGLE_BLOCK_LANES = 8192  # padded-N up to this -> single fused kernel


# ----------------------------- shared math ---------------------------------
def _sigmoid2(z):
    # module's sigmoid: 1/(1+exp(-2z)) == 0.5*(1+tanh(z)) (single EUP tanh)
    return 0.5 * (1.0 + jnp.tanh(z))


def _utility(x0, x1, function_choice):
    """Utility of component arrays x0, x1 (broadcastable shapes). Static dispatch."""
    if function_choice == 0:
        return jnp.maximum(x0 - 7.5, 0.0)
    if function_choice == 1:
        return jnp.maximum(x1 - 7.5, 0.0)
    if function_choice == 2:
        return _sigmoid2((x0 - 2.5) * 2.0) * _sigmoid2((x1 - 2.5) * 2.0)
    if function_choice == 3:
        return jnp.clip((x0 + x1) * 0.5 - 9.0, 0.0, 1.0)
    if function_choice == 4:
        return _sigmoid2(x0 - 6.0)
    if function_choice == 5:
        return _sigmoid2(0.2 * x0 + 0.8 * x1 - 2.5) * _sigmoid2(0.8 * x0 + 0.2 * x1 - 2.5)
    raise ValueError(f"bad function_choice: {function_choice}")


# ------------------------- kernel 1: fused (small N) ------------------------
def _fused_kernel(xt_ref, out_ref, *, function_choice, norm, keep_scale):
    xt = xt_ref[...]                                   # (2, NP) f32, lanes = batch
    x0 = xt[0:1, :]
    x1 = xt[1:2, :]

    if norm:
        # fresh-state running min/max == per-component batch min/max
        # (edge padding keeps the reduction exact).
        col_min = jnp.min(xt, axis=1, keepdims=True)   # (2, 1)
        col_max = jnp.max(xt, axis=1, keepdims=True)   # (2, 1)
        if keep_scale:
            d = col_max - col_min
            scale = jnp.maximum(d[0:1, :], d[1:2, :])  # (1, 1) max over R=2
            middle = (col_max + col_min) * 0.5
            min_input = middle - scale * 0.5
            max_input = middle + scale * 0.5
        else:
            min_input = col_min
            max_input = col_max

        rng = max_input - min_input                    # (2, 1)
        inv_d = 1.0 / (rng + 1e-5)                     # hoisted: 2 divides total
        # reciprocal-multiply normalisation (broadcast (1,1) over lanes)
        xn0 = (x0 - min_input[0:1, :]) * inv_d[0:1, :]
        xn1 = (x1 - min_input[1:2, :]) * inv_d[1:2, :]
        u = _utility(xn0, xn1, function_choice)        # (1, NP)

        # min_row == (min_input - min_input) * inv_d == 0 exactly
        zero = jnp.zeros((1, 1), jnp.float32)
        min_util = _utility(zero, zero, function_choice)          # (1, 1)
        m0 = rng[0:1, :] * inv_d[0:1, :]
        m1 = rng[1:2, :] * inv_d[1:2, :]
        max_util = _utility(m0, m1, function_choice)              # (1, 1)
        out_scale = (rng[0:1, :] + rng[1:2, :]) * 0.5             # mean over R=2
        renorm = out_scale / (max_util - min_util + 1e-6)         # one scalar divide
        u = (u - min_util) * renorm
    else:
        # norm=False: module never updates min/max and applies no input/output
        # normalisation -> utility of the raw rewards.
        u = _utility(x0, x1, function_choice)

    out_ref[...] = u                                   # (1, NP) lane-dense store


# ------------------- kernel 2: column min/max reduction ---------------------
def _minmax_kernel(xt_ref, mn_ref, mx_ref):
    @pl.when(pl.program_id(0) == 0)
    def _():
        mn_ref[...] = jnp.full(mn_ref.shape, jnp.inf, dtype=mn_ref.dtype)
        mx_ref[...] = jnp.full(mx_ref.shape, -jnp.inf, dtype=mx_ref.dtype)

    xt = xt_ref[...]                                   # (2, TN)
    mn_ref[...] = jnp.minimum(mn_ref[...], jnp.min(xt, axis=1, keepdims=True))
    mx_ref[...] = jnp.maximum(mx_ref[...], jnp.max(xt, axis=1, keepdims=True))


# ------------- kernel 3: tiled elementwise normalise + utility --------------
def _apply_kernel(params_ref, xt_ref, out_ref, *, function_choice, norm):
    # params (SMEM, f32[6]): [min0, min1, inv_d0, inv_d1, min_util, renorm]
    x0 = xt_ref[0:1, :]                                # (1, TN)
    x1 = xt_ref[1:2, :]
    if norm:
        x0 = (x0 - params_ref[0]) * params_ref[2]      # reciprocal-multiply
        x1 = (x1 - params_ref[1]) * params_ref[3]
    u = _utility(x0, x1, function_choice)
    if norm:
        u = (u - params_ref[4]) * params_ref[5]
    out_ref[...] = u                                   # (1, TN) lane-dense store


# --------------------------------- wrapper ----------------------------------
@functools.partial(jax.jit, static_argnames=("function_choice", "norm", "keep_scale"))
def diverse_goal_utility(x, function_choice=1, norm=True, keep_scale=True):
    """x: (N, R=2) rewards -> utility (N,)."""
    x = x.astype(jnp.float32)
    n, r = x.shape
    assert r == 2, "the module's utility functions are defined for reward_shape=2"

    xt = x.T                                           # (2, N): batch on lane axis
    n128 = ((n + 127) // 128) * 128

    # ---- small batch: one fused launch ------------------------------------
    if n128 <= _SINGLE_BLOCK_LANES:
        n_pad = n128
        xt_p = jnp.pad(xt, ((0, 0), (0, n_pad - n)), mode="edge")
        kernel = functools.partial(_fused_kernel, function_choice=function_choice,
                                   norm=norm, keep_scale=keep_scale)
        out = pl.pallas_call(
            kernel,
            out_shape=jax.ShapeDtypeStruct((1, n_pad), jnp.float32),
            grid=(1,),
            in_specs=[pl.BlockSpec((2, n_pad), lambda i: (0, 0))],
            out_specs=pl.BlockSpec((1, n_pad), lambda i: (0, 0)),
        )(xt_p)
        return out[0, :n]

    # ---- large batch: two-pass, lane-tiled, pipelined ----------------------
    tn = _TILE_LANES
    n_pad = ((n + tn - 1) // tn) * tn
    xt_p = jnp.pad(xt, ((0, 0), (0, n_pad - n)), mode="edge")
    nt = n_pad // tn

    if norm:
        mn, mx = pl.pallas_call(
            _minmax_kernel,
            out_shape=(jax.ShapeDtypeStruct((2, 1), jnp.float32),
                       jax.ShapeDtypeStruct((2, 1), jnp.float32)),
            grid=(nt,),
            in_specs=[pl.BlockSpec((2, tn), lambda i: (0, i))],
            out_specs=(pl.BlockSpec((2, 1), lambda i: (0, 0)),
                       pl.BlockSpec((2, 1), lambda i: (0, 0))),
            compiler_params=pltpu.CompilerParams(dimension_semantics=("arbitrary",)),
        )(xt_p)
        col_min = mn[:, 0]
        col_max = mx[:, 0]
        if keep_scale:
            scale = jnp.max(col_max - col_min)
            middle = (col_max + col_min) * 0.5
            min_input = middle - scale * 0.5
            max_input = middle + scale * 0.5
        else:
            min_input, max_input = col_min, col_max
        rng = max_input - min_input
        inv_d = 1.0 / (rng + 1e-5)
        max_row = rng * inv_d
        zero = jnp.zeros((), jnp.float32)
        min_util = _utility(zero, zero, function_choice)
        max_util = _utility(max_row[0], max_row[1], function_choice)
        renorm = jnp.mean(rng) / (max_util - min_util + 1e-6)
        params = jnp.stack([min_input[0], min_input[1], inv_d[0], inv_d[1],
                            min_util, renorm]).astype(jnp.float32)
    else:
        params = jnp.zeros((6,), jnp.float32)          # unused when norm=False

    kernel = functools.partial(_apply_kernel, function_choice=function_choice, norm=norm)
    out = pl.pallas_call(
        kernel,
        out_shape=jax.ShapeDtypeStruct((1, n_pad), jnp.float32),
        grid=(nt,),
        in_specs=[pl.BlockSpec(memory_space=pltpu.MemorySpace.SMEM),
                  pl.BlockSpec((2, tn), lambda i: (0, i))],
        out_specs=pl.BlockSpec((1, tn), lambda i: (0, i)),
        compiler_params=pltpu.CompilerParams(dimension_semantics=("parallel",)),
    )(params, xt_p)
    return out[0, :n]


# ----------------------------- NumPy reference ------------------------------
def _np_sigmoid2(z):
    return 1.0 / (1.0 + np.exp(-2.0 * z))


_NP_UTILS = [
    lambda x: np.clip(x[:, 0] - 7.5, 0.0, np.inf),
    lambda x: np.clip(x[:, 1] - 7.5, 0.0, np.inf),
    lambda x: _np_sigmoid2((x[:, 0] - 2.5) * 2) * _np_sigmoid2((x[:, 1] - 2.5) * 2),
    lambda x: np.clip(x.mean(1) - 9.0, 0.0, 1.0),
    lambda x: _np_sigmoid2(x[:, 0] - 6.0),
    lambda x: _np_sigmoid2(0.2 * x[:, 0] + 0.8 * x[:, 1] - 2.5)
              * _np_sigmoid2(0.8 * x[:, 0] + 0.2 * x[:, 1] - 2.5),
]


def numpy_reference(x, function_choice=1, norm=True, keep_scale=True):
    x = np.asarray(x, dtype=np.float32)
    min_val = np.minimum(x.min(0), np.full(x.shape[1], np.inf))
    max_val = np.maximum(x.max(0), np.full(x.shape[1], -np.inf))
    if keep_scale:
        scale = (max_val - min_val).max()
        middle = (max_val + min_val) / 2
        min_input = middle - scale / 2
        max_input = middle + scale / 2
    else:
        min_input = min_val
        max_input = max_val
    inputs = np.concatenate([[min_input], [max_input], x], 0)
    if norm:
        inputs = (inputs - np.expand_dims(min_input, 0)) / np.expand_dims(
            max_input - min_input + 1e-05, 0)
    utilities = _NP_UTILS[function_choice](inputs)
    min_util, max_util, util = utilities[0], utilities[1], utilities[2:]
    if norm:
        util = (util - min_util) / (max_util - min_util + 1e-6)
        util = util * (max_input - min_input).mean()
    return util


if __name__ == "__main__":
    key = jax.random.PRNGKey(0)
    N, R = 8, 2  # batch of 8 reward vectors, reward_shape = 2
    x = jax.random.uniform(key, (N, R), dtype=jnp.float32, minval=0.0, maxval=12.0)
    xn = np.asarray(x)

    # default module config (function_choice=1, norm=True, keep_scale=True)
    out = jax.block_until_ready(diverse_goal_utility(x, function_choice=1))
    assert out.shape == (N,)
    assert np.allclose(np.asarray(out), numpy_reference(xn, 1), atol=1e-4)

    # sigmoid-based utilities exercise the tanh path.  For fc=2 the module's
    # re-normalisation divides by ~7e-6, amplifying tiny fp differences between
    # the tanh- and exp-form sigmoid, so compare with a relative tolerance.
    out2 = jax.block_until_ready(diverse_goal_utility(x, function_choice=2))
    assert np.allclose(np.asarray(out2), numpy_reference(xn, 2), rtol=5e-3, atol=1e-4)

    out5 = jax.block_until_ready(diverse_goal_utility(x, function_choice=5))
    assert np.allclose(np.asarray(out5), numpy_reference(xn, 5), rtol=5e-3, atol=1e-4)

    # larger batch -> exercises the two-pass tiled path (min/max reduction
    # kernel + SMEM params + lane-tiled elementwise kernel, parallel grid axis)
    xl = jax.random.uniform(jax.random.PRNGKey(1), (20000, R), dtype=jnp.float32,
                            minval=0.0, maxval=12.0)
    outl = jax.block_until_ready(diverse_goal_utility(xl, function_choice=5))
    assert outl.shape == (20000,)
    assert np.allclose(np.asarray(outl), numpy_reference(np.asarray(xl), 5),
                       rtol=5e-3, atol=1e-4)

    print("KERNEL_OK")
</pallas_src>

<mosaic_0001>
module attributes {stable_mosaic.version = 11 : i64} {
  func.func @_fused_kernel(%arg0: i32, %arg1: memref<2x128xf32, #tpu.memory_space<vmem>>, %arg2: memref<1x128xf32, #tpu.memory_space<vmem>>) attributes {dimension_semantics = [#tpu.dimension_semantics<arbitrary>], iteration_bounds = array<i64: 1>, scalar_prefetch = 0 : i64, scratch_operands = 0 : i64, tpu.core_type = #tpu.core_type<tc>, window_params = [{pipeline_mode = #tpu.pipeline_mode<synchronous>, transform_indices = @transform_0, window_bounds = array<i64: 2, 128>}, {pipeline_mode = #tpu.pipeline_mode<synchronous>, transform_indices = @transform_1, window_bounds = array<i64: 1, 128>}]} {
    %c0 = arith.constant 0 : index
    %c0_0 = arith.constant 0 : index
    %0 = vector.load %arg1[%c0, %c0_0] : memref<2x128xf32, #tpu.memory_space<vmem>>, vector<2x128xf32>
    %1 = vector.extract_strided_slice %0 {offsets = [1, 0], sizes = [1, 128], strides = [1, 1]} : vector<2x128xf32> to vector<1x128xf32>
    %cst = arith.constant dense<0x7F800000> : vector<2xf32>
    %2 = vector.multi_reduction <minimumf>, %0, %cst [1] : vector<2x128xf32> to vector<2xf32>
    %3 = vector.shape_cast %2 : vector<2xf32> to vector<2x1xf32>
    %cst_1 = arith.constant dense<0xFF800000> : vector<2xf32>
    %4 = vector.multi_reduction <maximumf>, %0, %cst_1 [1] : vector<2x128xf32> to vector<2xf32>
    %5 = vector.shape_cast %4 : vector<2xf32> to vector<2x1xf32>
    %6 = arith.subf %5, %3 : vector<2x1xf32>
    %7 = vector.extract_strided_slice %6 {offsets = [0, 0], sizes = [1, 1], strides = [1, 1]} : vector<2x1xf32> to vector<1x1xf32>
    %8 = vector.extract_strided_slice %6 {offsets = [1, 0], sizes = [1, 1], strides = [1, 1]} : vector<2x1xf32> to vector<1x1xf32>
    %9 = arith.maximumf %7, %8 : vector<1x1xf32>
    %10 = arith.addf %5, %3 : vector<2x1xf32>
    %cst_2 = arith.constant 5.000000e-01 : f32
    %11 = vector.broadcast %cst_2 : f32 to vector<2x1xf32>
    %12 = arith.mulf %10, %11 : vector<2x1xf32>
    %cst_3 = arith.constant 5.000000e-01 : f32
    %13 = vector.broadcast %cst_3 : f32 to vector<1x1xf32>
    %14 = arith.mulf %9, %13 : vector<1x1xf32>
    %15 = vector.broadcast %14 : vector<1x1xf32> to vector<2x1xf32>
    %16 = arith.subf %12, %15 : vector<2x1xf32>
    %cst_4 = arith.constant 5.000000e-01 : f32
    %17 = vector.broadcast %cst_4 : f32 to vector<1x1xf32>
    %18 = arith.mulf %9, %17 : vector<1x1xf32>
    %19 = vector.broadcast %18 : vector<1x1xf32> to vector<2x1xf32>
    %20 = arith.addf %12, %19 : vector<2x1xf32>
    %21 = arith.subf %20, %16 : vector<2x1xf32>
    %cst_5 = arith.constant 9.99999974E-6 : f32
    %22 = vector.broadcast %cst_5 : f32 to vector<2x1xf32>
    %23 = arith.addf %21, %22 : vector<2x1xf32>
    %cst_6 = arith.constant 1.000000e+00 : f32
    %24 = vector.broadcast %cst_6 : f32 to vector<2x1xf32>
    %25 = arith.divf %24, %23 : vector<2x1xf32>
    %26 = vector.extract_strided_slice %16 {offsets = [1, 0], sizes = [1, 1], strides = [1, 1]} : vector<2x1xf32> to vector<1x1xf32>
    %27 = vector.broadcast %26 : vector<1x1xf32> to vector<1x128xf32>
    %28 = arith.subf %1, %27 : vector<1x128xf32>
    %29 = vector.extract_strided_slice %25 {offsets = [1, 0], sizes = [1, 1], strides = [1, 1]} : vector<2x1xf32> to vector<1x1xf32>
    %30 = vector.broadcast %29 : vector<1x1xf32> to vector<1x128xf32>
    %31 = arith.mulf %28, %30 : vector<1x128xf32>
    %cst_7 = arith.constant 7.500000e+00 : f32
    %32 = vector.broadcast %cst_7 : f32 to vector<1x128xf32>
    %33 = arith.subf %31, %32 : vector<1x128xf32>
    %cst_8 = arith.constant 0.000000e+00 : f32
    %34 = vector.broadcast %cst_8 : f32 to vector<1x128xf32>
    %35 = arith.maximumf %33, %34 : vector<1x128xf32>
    %cst_9 = arith.constant 0.000000e+00 : f32
    %36 = vector.broadcast %cst_9 : f32 to vector<1x1xf32>
    %cst_10 = arith.constant 7.500000e+00 : f32
    %37 = vector.broadcast %cst_10 : f32 to vector<1x1xf32>
    %38 = arith.subf %36, %37 : vector<1x1xf32>
    %cst_11 = arith.constant 0.000000e+00 : f32
    %39 = vector.broadcast %cst_11 : f32 to vector<1x1xf32>
    %40 = arith.maximumf %38, %39 : vector<1x1xf32>
    %41 = vector.extract_strided_slice %21 {offsets = [1, 0], sizes = [1, 1], strides = [1, 1]} : vector<2x1xf32> to vector<1x1xf32>
    %42 = vector.extract_strided_slice %25 {offsets = [1, 0], sizes = [1, 1], strides = [1, 1]} : vector<2x1xf32> to vector<1x1xf32>
    %43 = arith.mulf %41, %42 : vector<1x1xf32>
    %cst_12 = arith.constant 7.500000e+00 : f32
    %44 = vector.broadcast %cst_12 : f32 to vector<1x1xf32>
    %45 = arith.subf %43, %44 : vector<1x1xf32>
    %cst_13 = arith.constant 0.000000e+00 : f32
    %46 = vector.broadcast %cst_13 : f32 to vector<1x1xf32>
    %47 = arith.maximumf %45, %46 : vector<1x1xf32>
    %48 = vector.extract_strided_slice %21 {offsets = [0, 0], sizes = [1, 1], strides = [1, 1]} : vector<2x1xf32> to vector<1x1xf32>
    %49 = vector.extract_strided_slice %21 {offsets = [1, 0], sizes = [1, 1], strides = [1, 1]} : vector<2x1xf32> to vector<1x1xf32>
    %50 = arith.addf %48, %49 : vector<1x1xf32>
    %cst_14 = arith.constant 5.000000e-01 : f32
    %51 = vector.broadcast %cst_14 : f32 to vector<1x1xf32>
    %52 = arith.mulf %50, %51 : vector<1x1xf32>
    %53 = arith.subf %47, %40 : vector<1x1xf32>
    %cst_15 = arith.constant 9.99999997E-7 : f32
    %54 = vector.broadcast %cst_15 : f32 to vector<1x1xf32>
    %55 = arith.addf %53, %54 : vector<1x1xf32>
    %56 = arith.divf %52, %55 : vector<1x1xf32>
    %57 = vector.broadcast %40 : vector<1x1xf32> to vector<1x128xf32>
    %58 = arith.subf %35, %57 : vector<1x128xf32>
    %59 = vector.broadcast %56 : vector<1x1xf32> to vector<1x128xf32>
    %60 = arith.mulf %58, %59 : vector<1x128xf32>
    %c0_16 = arith.constant 0 : index
    %c0_17 = arith.constant 0 : index
    %61 = vector.load %arg2[%c0_16, %c0_17] : memref<1x128xf32, #tpu.memory_space<vmem>>, vector<1x128xf32>
    tpu.vector_store %arg2[%c0_16, %c0_17], %60 {strides = array<i32>} : memref<1x128xf32, #tpu.memory_space<vmem>>, vector<1x128xf32>,
    return
  }
  func.func @transform_0(%arg0: i32) -> (i32, i32) {
    %c0_i32 = arith.constant 0 : i32
    %c0_i32_0 = arith.constant 0 : i32
    %c0_i32_1 = arith.constant 0 : i32
    return %c0_i32, %c0_i32_0 : i32, i32
  }
  func.func @transform_1(%arg0: i32) -> (i32, i32) {
    %c0_i32 = arith.constant 0 : i32
    %c0_i32_0 = arith.constant 0 : i32
    %c0_i32_1 = arith.constant 0 : i32
    return %c0_i32, %c0_i32_0 : i32, i32
  }
}

</mosaic_0001>

<llo_original>
// kernel: diverse_goal_utility.1
$region0: #{diverse_goal_utility.1}
  #allocation0 [shape = 'u32[]', space=smem, size = 0x4, offset = 0x4, fixed_abs, tag = 'smem constant byte address 0x4 - core index']
  #allocation1 [shape = 'u32[144,128]{1,0:T(1,128)}', space=vmem, size = 0x12000, scoped, tag = 'internal scratch']
  %s0 = inlined_call_operand.vmem [shape: f32[2,128], index: 0, kind: input, shape index: {}]
  %s1 = inlined_call_operand.vmem [shape: f32[1,128], index: 1, kind: output, shape index: {}]
  %s2 = sld [smem:[#allocation0]]
  $region14: #{diverse_goal_utility.1} parent=0
    _
  %s4 = ssub.s32 1, %s2
  %s5 = scalar_select 0, %s4, %s2
  // Predicated region
  $region2: #{diverse_goal_utility.1} parent=0 // pred_check
    _
  $region3: #{diverse_goal_utility.1} parent=0 // pred_check_branch
    %7 = sbr.rel (0) target = $region5
  $region4: #{diverse_goal_utility.1} parent=0 // pred_region
    _
  $region5: #{diverse_goal_utility.1} parent=0 // pred_fallthru
    _
  %v8 = vld [vmem:[%s0] sm:$0x3]
  %vm9 = vcmask 1041408
  %v10 = vsel %vm9, %v8, inf
  %11 = vmin.xlane.f32.xlu0 %v10
  %v12 = vpop.xlane.xlu0 %11
  %v13 = vsel %vm9, %v8, -inf
  %14 = vmax.xlane.f32.xlu0 %v13
  %v15 = vpop.xlane.xlu0 %14
  %v16 = vsub.f32 %v15, %v12
  %v18 = vrot.slane %v16, 1
  %v20 = vmax.f32 %v16, %v18
  %v21 = vadd.f32 %v15, %v12
  %v22 = vmul.f32 %v21, 0.5
  %v23 = vmul.f32 %v20, 0.5
  %v24 = vlaneseq
  %v25 = vshrl.u32 %v24, 7
  %v26 = vsub.s32 0, %v25
  %v27 = vrot.slane %v23, %v26
  %v28 = vsub.f32 %v22, %v27
  %v29 = vadd.f32 %v22, %v27
  %v30 = vsub.f32 %v29, %v28
  %v31 = vadd.f32 %v30, 1e-05
  %v32 = vrcp.pop %v31
  %v33 = vmul.f32 1.0, %v32
  %35 = vset.pattern.permute.xlu0 0
  %36 = vperm.xlu0 %35, %v28
  %v37 = vpop.permute.xlu0 %36
  %v39 = vsub.f32 %v8, %v37
  %41 = vset.pattern.permute.xlu0 0
  %42 = vperm.xlu0 %41, %v33
  %v43 = vpop.permute.xlu0 %42
  %v45 = vmul.f32 %v39, %v43
  %v46 = vsub.f32 %v45, 7.5
  %v47 = vmax.f32 %v46, 0.0
  %v48 = vmul.f32 %v30, %v33
  %v49 = vsub.f32 %v48, 7.5
  %v50 = vmax.f32 %v49, 0.0
  %v52 = vrot.slane %v30, 1
  %v54 = vadd.f32 %v30, %v52
  %v55 = vmul.f32 %v54, 0.5
  %v56 = vadd.f32 %v50, 1e-06
  %v58 = vrot.slane %v56, 1
  %v60 = vrcp.pop %v58
  %v61 = vmul.f32 %v55, %v60
  %63 = vset.pattern.permute.xlu0 0
  %64 = vperm.xlu0 %63, %v61
  %v65 = vpop.permute.xlu0 %64
  %v66 = vrot.slane %v65, 7
  %v68 = vmul.f32 %v47, %v66
  %69 = vst [vmem:[%s1 - $0x1] sm:$0x2] %v68
  // Predicated region
  $region6: #{diverse_goal_utility.1} parent=0 // pred_check
    _
  $region7: #{diverse_goal_utility.1} parent=0 // pred_check_branch
    %71 = sbr.rel (0) target = $region9
  $region8: #{diverse_goal_utility.1} parent=0 // pred_region
    _
  $region9: #{diverse_goal_utility.1} parent=0 // pred_fallthru
    _
  // Predicated region
  $region10: #{diverse_goal_utility.1} parent=0 // pred_check
    _
  $region11: #{diverse_goal_utility.1} parent=0 // pred_check_branch
    %73 = sbr.rel (0) target = $region13
  $region12: #{diverse_goal_utility.1} parent=0 // pred_region
    _
  $region13: #{diverse_goal_utility.1} parent=0 // pred_fallthru
    _

</llo_original>
